<compile_context>
chip_gen: v5e
topology: v5e:2x2
jax: 0.10.0
libtpu: 0.0.40
codegen_flags: <defaults>
</compile_context>

<pallas_src>
import jax
import jax.numpy as jnp
from jax import lax
from jax.experimental import pallas as pl
from jax.experimental.pallas import tpu as pltpu

EPS = 1e-12  # matches torch.nn.functional.normalize default


def _l2_normalize_kernel(x_ref, o_ref):
    # x_ref / o_ref: (TM, D) tile in VMEM; each row normalized independently.
    xf = x_ref[...].astype(jnp.float32)
    # row-wise squared norm (XLU lane reduction), accumulated in f32
    sq = jnp.sum(xf * xf, axis=-1, keepdims=True)
    # rsqrt(max(sq, eps^2)) == 1 / max(||x||, eps); single EUP op,
    # zero rows -> 0 * rsqrt(eps^2) == 0 (matches torch clamp_min semantics).
    inv = lax.rsqrt(jnp.maximum(sq, jnp.float32(EPS * EPS)))
    # scale in f32 (free at mem-bound; avoids emulated bf16 VALU on v5e),
    # single cast at the store.
    o_ref[...] = (xf * inv).astype(o_ref.dtype)


def _round_up(v, m):
    return ((v + m - 1) // m) * m


def lambda_layer(x, *, tm=None, target_tile_bytes=2 << 20):
    """LambdaLayer(lambd=F.normalize).forward(x) for x of shape (N, D).

    Row-wise L2 normalization, equivalent to torch F.normalize(x, p=2, dim=1).
    """
    N, D = x.shape
    dtype = x.dtype
    itemsize = jnp.dtype(dtype).itemsize

    # Sublane alignment for the row tile (f32: 8, bf16: 16, int8/fp8: 32).
    align = 8 if itemsize >= 4 else (16 if itemsize == 2 else 32)

    # VMEM cap: stay well inside the smallest generation (v7x: 64 MiB per TC).
    try:
        vmem_cap = int(pltpu.get_tpu_info().vmem_capacity_bytes)
    except Exception:  # pragma: no cover - conservative fallback
        vmem_cap = 64 << 20
    headroom = 4 << 20
    hard_cap = max(16 << 20, min(48 << 20, vmem_cap - (16 << 20)))

    row_bytes = D * itemsize          # one row of the input/output tile
    f32_row_bytes = D * 4             # one row of the f32 temporaries
    # per-row VMEM cost: 2-deep in + 2-deep out buffers + ~2 f32 temp tiles
    per_row_cost = 4 * row_bytes + 2 * f32_row_bytes

    if tm is None:
        # ~2 MiB input tile hits the >=85%-of-roofline regime measured on v6e.
        tm = max(align, (target_tile_bytes // row_bytes) // align * align)
        # Clamp so the explicit VMEM accounting fits the budget.
        max_rows_budget = max(align,
                              ((hard_cap - headroom) // per_row_cost) // align * align)
        tm = min(tm, max_rows_budget)
        # Keep ~4 grid steps for pipelining / v7x 2-TC sharding, but only if
        # that does not push the tile below ~1 MiB (single-TC chips lose more
        # to per-step overhead than they gain).
        tm_steps = _round_up(max(1, -(-N // 4)), align)
        if tm_steps * row_bytes >= (1 << 20):
            tm = min(tm, tm_steps)
        tm = max(tm, align)
    else:
        tm = max(align, _round_up(int(tm), align))

    # Full-extent row block when the whole array fits in one tile
    # (exempt from the sublane alignment rule).
    if tm >= N:
        tm = N

    tile_in_bytes = tm * row_bytes
    tile_f32_bytes = tm * f32_row_bytes
    vmem_limit_bytes = int(min(max(4 * tile_in_bytes + 2 * tile_f32_bytes + headroom,
                                   16 << 20),
                               hard_cap))

    grid = (pl.cdiv(N, tm),)
    cost = pl.CostEstimate(
        flops=3 * N * D,
        transcendentals=N,
        bytes_accessed=2 * N * D * itemsize,
    )

    return pl.pallas_call(
        _l2_normalize_kernel,
        out_shape=jax.ShapeDtypeStruct((N, D), dtype),
        grid_spec=pltpu.PrefetchScalarGridSpec(
            num_scalar_prefetch=0,
            grid=grid,
            in_specs=[pl.BlockSpec((tm, D), lambda i: (i, 0))],
            out_specs=pl.BlockSpec((tm, D), lambda i: (i, 0)),
        ),
        compiler_params=pltpu.CompilerParams(
            dimension_semantics=("parallel",),
            vmem_limit_bytes=vmem_limit_bytes,
        ),
        cost_estimate=cost,
    )(x)


def _reference(x):
    # pure-JAX reference matching torch F.normalize(x, p=2, dim=1, eps=1e-12)
    norm = jnp.sqrt(jnp.sum(x.astype(jnp.float32) ** 2, axis=1, keepdims=True))
    return (x.astype(jnp.float32) / jnp.maximum(norm, EPS)).astype(x.dtype)


if __name__ == "__main__":
    key = jax.random.PRNGKey(0)

    # Case 1: lane-aligned features, 16 rows x 128 dims (f32).
    x1 = jax.random.normal(key, (16, 128), dtype=jnp.float32)
    out1 = jax.block_until_ready(lambda_layer(x1))
    ref1 = _reference(x1)
    assert out1.shape == x1.shape and out1.dtype == x1.dtype
    assert jnp.allclose(out1, ref1, atol=2e-5, rtol=2e-5), "mismatch (aligned f32)"

    # Case 2: ragged row count + non-128 feature dim (no pad/slice needed now).
    k2 = jax.random.PRNGKey(1)
    x2 = jax.random.normal(k2, (37, 96), dtype=jnp.float32)
    out2 = jax.block_until_ready(lambda_layer(x2))
    ref2 = _reference(x2)
    assert out2.shape == x2.shape and out2.dtype == x2.dtype
    assert jnp.allclose(out2, ref2, atol=2e-5, rtol=2e-5), "mismatch (ragged f32)"

    # Case 3: bf16 input (f32 reduction + scale, cast at the store).
    k3 = jax.random.PRNGKey(2)
    x3 = jax.random.normal(k3, (64, 160), dtype=jnp.bfloat16)
    out3 = jax.block_until_ready(lambda_layer(x3))
    ref3 = _reference(x3)
    assert out3.shape == x3.shape and out3.dtype == x3.dtype
    assert jnp.allclose(out3.astype(jnp.float32), ref3.astype(jnp.float32),
                        atol=2e-2, rtol=2e-2), "mismatch (bf16)"

    print("KERNEL_OK")
</pallas_src>

<mosaic_0001>
module attributes {stable_mosaic.version = 11 : i64} {
  func.func @_l2_normalize_kernel(%arg0: i32, %arg1: memref<16x128xf32, #tpu.memory_space<vmem>>, %arg2: memref<16x128xf32, #tpu.memory_space<vmem>>) attributes {dimension_semantics = [#tpu.dimension_semantics<parallel>], iteration_bounds = array<i64: 1>, scalar_prefetch = 0 : i64, scratch_operands = 0 : i64, tpu.core_type = #tpu.core_type<tc>, window_params = [{transform_indices = @transform_0, window_bounds = array<i64: 16, 128>}, {transform_indices = @transform_1, window_bounds = array<i64: 16, 128>}]} {
    %c0 = arith.constant 0 : index
    %c0_0 = arith.constant 0 : index
    %0 = vector.load %arg1[%c0, %c0_0] : memref<16x128xf32, #tpu.memory_space<vmem>>, vector<16x128xf32>
    %1 = arith.mulf %0, %0 : vector<16x128xf32>
    %cst = arith.constant dense<0.000000e+00> : vector<16xf32>
    %2 = vector.multi_reduction <add>, %1, %cst [1] : vector<16x128xf32> to vector<16xf32>
    %3 = vector.shape_cast %2 : vector<16xf32> to vector<16x1xf32>
    %cst_1 = arith.constant 1.000000e-24 : f32
    %4 = vector.broadcast %cst_1 : f32 to vector<16x1xf32>
    %5 = arith.maximumf %3, %4 : vector<16x1xf32>
    %6 = math.rsqrt %5 : vector<16x1xf32>
    %7 = vector.broadcast %6 : vector<16x1xf32> to vector<16x128xf32>
    %8 = arith.mulf %0, %7 : vector<16x128xf32>
    %c0_2 = arith.constant 0 : index
    %c0_3 = arith.constant 0 : index
    %9 = vector.load %arg2[%c0_2, %c0_3] : memref<16x128xf32, #tpu.memory_space<vmem>>, vector<16x128xf32>
    tpu.vector_store %arg2[%c0_2, %c0_3], %8 {strides = array<i32>} : memref<16x128xf32, #tpu.memory_space<vmem>>, vector<16x128xf32>,
    return
  }
  func.func @transform_0(%arg0: i32) -> (i32, i32) {
    %c0_i32 = arith.constant 0 : i32
    %c0_i32_0 = arith.constant 0 : i32
    return %arg0, %c0_i32 : i32, i32
  }
  func.func @transform_1(%arg0: i32) -> (i32, i32) {
    %c0_i32 = arith.constant 0 : i32
    %c0_i32_0 = arith.constant 0 : i32
    return %arg0, %c0_i32 : i32, i32
  }
}

</mosaic_0001>

<llo_original>
// kernel: tpu_custom_call.1
$region0: #{tpu_custom_call.1}
  #allocation0 [shape = 'u32[]', space=smem, size = 0x4, offset = 0x4, fixed_abs, tag = 'smem constant byte address 0x4 - core index']
  #allocation1 [shape = 'u32[72,128]{1,0:T(1,128)}', space=vmem, size = 0x9000, scoped, tag = 'internal scratch']
  %s0 = inlined_call_operand.hbm [shape: f32[16,128], index: 0, kind: input, shape index: {}]
  %s1 = inlined_call_operand.hbm [shape: f32[16,128], index: 1, kind: output, shape index: {}]
  %s2 = sld [smem:[#allocation0]]
  $region18: #{tpu_custom_call.1} parent=0
    _
  %s4 = ssub.s32 1, %s2
  %s5 = scalar_select 0, %s4, %s2
  $region1: #{tpu_custom_call.1} parent=0
    #allocation2 [shape = 'u8[8192]{0}', space=vmem, size = 0x2000, scoped, tag = 'input window, operand 0, single buffered']
    #allocation3 [shape = 's32[1]{0}', space=sflag, size = 0x4, scoped, tag = 'scoped memory for tpu_custom_call.1']
    #allocation4 [shape = 's32[1]{0}', space=sflag, size = 0x4, scoped, tag = 'scoped memory for tpu_custom_call.1']
    #allocation5 [shape = 'u8[8192]{0}', space=vmem, size = 0x2000, scoped, tag = 'output window, operand 0, single buffered']
    %6 = vsyncpa [#allocation3], 0
    %7 = vsyncpa [#allocation4], 0
    // Predicated region
    $region2: #{tpu_custom_call.1} parent=1 // pred_check
      _
    $region3: #{tpu_custom_call.1} parent=1 // pred_check_branch
      %9 = sbr.rel (0) target = $region5
    $region4: #{tpu_custom_call.1} parent=1 // pred_region
      %11 = vsyncadd [#allocation3], 0
      %s12 = sshll.u32 %s0, 4
      %s13 = int_to_ptr.hbm [resolvable:$true] %s12
      %s14 = sshll.u32 [#allocation2], 4
      %s15 = int_to_ptr.vmem [resolvable:$true] %s14
      %20 = dma.hbm_to_vmem [thread:$0]  %s13, 256, %s15, [#allocation3], 128, 128, 8
    $region5: #{tpu_custom_call.1} parent=1 // pred_fallthru
      _
    // Predicated region
    $region6: #{tpu_custom_call.1} parent=1 // pred_check
      _
    $region7: #{tpu_custom_call.1} parent=1 // pred_check_branch
      %22 = sbr.rel (0) target = $region9
    $region8: #{tpu_custom_call.1} parent=1 // pred_region
      %24 = dma.done [#allocation3], 256
    $region9: #{tpu_custom_call.1} parent=1 // pred_fallthru
      _
    %v25 = vld [vmem:[#allocation2] sm:$0xff]
    %v26 = vld [vmem:[#allocation2 + $0x8] sm:$0xff]
    %v27 = vmul.f32 %v25, %v25
    %v28 = vmul.f32 %v26, %v26
    %29 = vadd.xlane.f32.xlu0 %v27
    %v30 = vpop.xlane.xlu0 %29
    %31 = vadd.xlane.f32.xlu0 %v28
    %v32 = vpop.xlane.xlu0 %31
    %v33 = vmax.f32 %v30, 1e-24
    %v34 = vmax.f32 %v32, 1e-24
    %v35 = vrsqrt.pop %v33
    %v36 = vmul.f32 %v35, %v33
    %v37 = vmul.f32 %v36, %v35
    %v38 = vmul.f32 0.5, %v37
    %v39 = vsub.f32 1.5, %v38
    %v40 = vmul.f32 %v35, %v39
    %vm41 = vweird.f32 %v33
    %vm42 = vweird.f32 %v35
    %vm43 = vmor %vm41, %vm42
    %v44 = vsel %vm43, %v35, %v40
    %v45 = vrsqrt.pop %v34
    %v46 = vmul.f32 %v45, %v34
    %v47 = vmul.f32 %v46, %v45
    %v48 = vmul.f32 0.5, %v47
    %v49 = vsub.f32 1.5, %v48
    %v50 = vmul.f32 %v45, %v49
    %vm51 = vweird.f32 %v34
    %vm52 = vweird.f32 %v45
    %vm53 = vmor %vm51, %vm52
    %v54 = vsel %vm53, %v45, %v50
    %v55 = vmul.f32 %v25, %v44
    %v56 = vmul.f32 %v26, %v54
    %57 = vst [vmem:[#allocation5] sm:$0xff] %v55
    %58 = vst [vmem:[#allocation5 + $0x8] sm:$0xff] %v56
    // Predicated region
    $region10: #{tpu_custom_call.1} parent=1 // pred_check
      _
    $region11: #{tpu_custom_call.1} parent=1 // pred_check_branch
      %60 = sbr.rel (0) target = $region13
    $region12: #{tpu_custom_call.1} parent=1 // pred_region
      %62 = vsyncadd [#allocation4], 0
      %s63 = sshll.u32 [#allocation5], 4
      %s64 = int_to_ptr.vmem [resolvable:$true] %s63
      %s65 = sshll.u32 %s1, 4
      %s66 = int_to_ptr.hbm [resolvable:$true] %s65
      %71 = dma.vmem_to_hbm [thread:$0]  %s64, 256, %s66, [#allocation4], 128, 128, 8
    $region13: #{tpu_custom_call.1} parent=1 // pred_fallthru
      _
    // Predicated region
    $region14: #{tpu_custom_call.1} parent=1 // pred_check
      _
    $region15: #{tpu_custom_call.1} parent=1 // pred_check_branch
      %73 = sbr.rel (0) target = $region17
    $region16: #{tpu_custom_call.1} parent=1 // pred_region
      %75 = dma.done [#allocation4], 256
    $region17: #{tpu_custom_call.1} parent=1 // pred_fallthru
      _
    %76 = vsyncpa [#allocation3], 1
    %77 = vsyncpa [#allocation4], 1

</llo_original>
